<compile_context>
chip_gen: v7x
topology: tpu7x:2x2x1
jax: 0.10.0
libtpu: 0.0.40
codegen_flags: <defaults>
</compile_context>

<pallas_src>
import jax
import jax.numpy as jnp
from jax.experimental import pallas as pl
from jax.experimental.pallas import tpu as pltpu


def _block_budget():
    """Return (target block bytes, scoped-VMEM limit) per TPU generation."""
    vmem_phys = None
    try:
        vmem_phys = getattr(pltpu.get_tpu_info(), "vmem_capacity_bytes", None)
    except Exception:
        vmem_phys = None
    if vmem_phys is None:
        vmem_phys = 64 << 20  # conservative default (v7x-sized)
    if vmem_phys >= (96 << 20):
        # v5e / v6e: 128 MiB physical VMEM -> 8 MiB blocks, raise scoped limit
        # above v5e's 16 MiB default (in+out double-buffered ~= 32 MiB).
        return 8 << 20, 64 << 20
    # v7x: 64 MiB physical -> 4 MiB blocks, ~16 MiB working set.
    return 4 << 20, 24 << 20


# ---------------------------------------------------------------------------
# Fast path: H and W already even. Lane-dense (T*C*H, W) streaming quantize.
# ---------------------------------------------------------------------------
def _quantize_kernel(x_ref, o_ref):
    # clamp -> *255 -> truncate to uint8 (values >= 0, so trunc == floor)
    # -> /255.  Equals the forward value of frames + (decoded - frames).detach()
    # with the codec skipped.
    x = x_ref[...].astype(jnp.float32)
    o_ref[...] = jnp.floor(jnp.clip(x, 0.0, 1.0) * 255.0) * (1.0 / 255.0)


def _quantize_2d(x2d, block_bytes, vmem_limit):
    rows, lanes = x2d.shape
    lane_tile = lanes                         # full lane dim (always legal)
    want = max(1, block_bytes // (4 * lanes))  # rows per ~block_bytes f32 block
    if want >= rows:
        row_tile = rows                       # full dim block (always legal)
    else:
        row_tile = max(8, (want // 8) * 8)    # keep sublane-multiple blocks
    grid = (pl.cdiv(rows, row_tile),)
    n = rows * lanes
    return pl.pallas_call(
        _quantize_kernel,
        out_shape=jax.ShapeDtypeStruct((rows, lanes), jnp.float32),
        grid=grid,
        in_specs=[pl.BlockSpec((row_tile, lane_tile), lambda i: (i, 0))],
        out_specs=pl.BlockSpec((row_tile, lane_tile), lambda i: (i, 0)),
        compiler_params=pltpu.CompilerParams(
            dimension_semantics=("parallel",),
            vmem_limit_bytes=vmem_limit),
        cost_estimate=pl.CostEstimate(
            flops=5 * n, transcendentals=0,
            bytes_accessed=n * (x2d.dtype.itemsize + 4)),
    )(x2d)


# ---------------------------------------------------------------------------
# Odd-resolution path: fused even-pad + quantize (no jnp.pad HBM round trip).
# View: input (T*C, H, W), output (T*C, H+pad_h, W+pad_w).
# ---------------------------------------------------------------------------
def _make_pad_quantize_kernel(H, W, pad_h, pad_w):
    def kernel(x_ref, o_ref):
        th = o_ref.shape[1]
        x = x_ref[...].astype(jnp.float32)                    # (1, th, W)
        q = jnp.floor(jnp.clip(x, 0.0, 1.0) * 255.0) * (1.0 / 255.0)
        if pad_h:
            # Zero the bottom pad row (input rows read past H are garbage from
            # the partial edge block; the select masks them out).
            h_idx = (jax.lax.broadcasted_iota(jnp.int32, q.shape, 1)
                     + pl.program_id(1) * th)
            q = jnp.where(h_idx < H, q, 0.0)
        o_ref[:, :, 0:W] = q
        if pad_w:
            o_ref[:, :, W:W + pad_w] = jnp.zeros((1, th, pad_w), jnp.float32)
    return kernel


def _pad_quantize(frames, pad_h, pad_w, block_bytes, vmem_limit):
    T, C, H, W = frames.shape
    H2, W2 = H + pad_h, W + pad_w
    TC = T * C
    x3d = frames.reshape(TC, H, W)
    # Row tile must be a multiple of 8 and <= H so the block is legal for both
    # the (TC, H, W) input and the (TC, H2, W2) output (pad_h <= 1).
    want = max(8, block_bytes // (4 * W2))
    h_cap = (H // 8) * 8
    th = min(h_cap, max(8, (want // 8) * 8))
    grid = (TC, pl.cdiv(H2, th))
    n = TC * H2 * W2
    out = pl.pallas_call(
        _make_pad_quantize_kernel(H, W, pad_h, pad_w),
        out_shape=jax.ShapeDtypeStruct((TC, H2, W2), jnp.float32),
        grid=grid,
        in_specs=[pl.BlockSpec((1, th, W), lambda i, j: (i, j, 0))],
        out_specs=pl.BlockSpec((1, th, W2), lambda i, j: (i, j, 0)),
        compiler_params=pltpu.CompilerParams(
            dimension_semantics=("parallel", "parallel"),
            vmem_limit_bytes=vmem_limit),
        cost_estimate=pl.CostEstimate(
            flops=5 * n, transcendentals=0,
            bytes_accessed=n * 4 + TC * H * W * frames.dtype.itemsize),
    )(x3d)
    return out.reshape(T, C, H2, W2)


# ---------------------------------------------------------------------------
# Public wrapper: JAX/Pallas equivalent of VideoCompression.forward (no codec).
# ---------------------------------------------------------------------------
def vp9_forward(frames, mask=None):
    """Args:
      frames: (T, C, H, W) float video frames, nominally in [0, 1].
      mask:   optional (T, 1, H, W) mask.
    Returns:
      (compressed_frames, mask) with H, W padded to even sizes.
    """
    T, C, H, W = frames.shape
    pad_h, pad_w = H % 2, W % 2
    block_bytes, vmem_limit = _block_budget()

    if pad_h or pad_w:
        if mask is not None:
            # Mask is C-times smaller than frames; a plain pad is cheap.
            mask = jnp.pad(mask, ((0, 0), (0, 0), (0, pad_h), (0, pad_w)))
        if H >= 8:
            out = _pad_quantize(frames, pad_h, pad_w, block_bytes, vmem_limit)
            return out, mask
        # TODO(synk): frames shorter than 8 rows fall back to an extra HBM pad
        # copy (block constraints leave no legal fused tiling there).
        frames = jnp.pad(frames, ((0, 0), (0, 0), (0, pad_h), (0, pad_w)))
        H, W = H + pad_h, W + pad_w

    # Lane-dense 2D view: rows = T*C*H (sublane axis), lanes = W (fast axis).
    x2d = frames.reshape(T * C * H, W)
    out2d = _quantize_2d(x2d, block_bytes, vmem_limit)
    return out2d.reshape(T, C, H, W), mask


if __name__ == "__main__":
    key = jax.random.PRNGKey(0)
    k1, k2 = jax.random.split(key)
    # Small video: T=2 frames, C=3 channels (RGB), 16x16 spatial.
    frames = jax.random.uniform(k1, (2, 3, 16, 16), dtype=jnp.float32,
                                minval=-0.1, maxval=1.1)  # exercise the clamp
    mask = (jax.random.uniform(k2, (2, 1, 16, 16)) > 0.5).astype(jnp.float32)

    # Pure-JAX reference of the quantization round-trip (codec skipped).
    ref = jnp.floor(jnp.clip(frames, 0.0, 1.0) * 255.0) * (1.0 / 255.0)

    out, out_mask = vp9_forward(frames, mask)
    out = jax.block_until_ready(out)
    assert out.shape == frames.shape
    assert float(jnp.max(jnp.abs(out - ref))) < 1e-6
    assert out_mask.shape == mask.shape

    # Odd H/W exercises the fused pad + quantize kernel path.
    frames_odd = frames[:, :, :15, :13]
    mask_odd = mask[:, :, :15, :13]
    out_odd, out_mask_odd = vp9_forward(frames_odd, mask_odd)
    out_odd = jax.block_until_ready(out_odd)
    assert out_odd.shape == (2, 3, 16, 14)
    padded = jnp.pad(frames_odd, ((0, 0), (0, 0), (0, 1), (0, 1)))
    ref_odd = jnp.floor(jnp.clip(padded, 0.0, 1.0) * 255.0) * (1.0 / 255.0)
    assert float(jnp.max(jnp.abs(out_odd - ref_odd))) < 1e-6
    assert out_mask_odd.shape == (2, 1, 16, 14)

    print("KERNEL_OK")
</pallas_src>

<mosaic_0001>
module attributes {stable_mosaic.version = 11 : i64} {
  func.func @_quantize_kernel(%arg0: i32, %arg1: memref<96x16xf32, #tpu.memory_space<vmem>>, %arg2: memref<96x16xf32, #tpu.memory_space<vmem>>) attributes {dimension_semantics = [#tpu.dimension_semantics<parallel>], iteration_bounds = array<i64: 1>, scalar_prefetch = 0 : i64, scratch_operands = 0 : i64, tpu.core_type = #tpu.core_type<tc>, window_params = [{transform_indices = @transform_0, window_bounds = array<i64: 96, 16>}, {transform_indices = @transform_1, window_bounds = array<i64: 96, 16>}]} {
    %c0 = arith.constant 0 : index
    %c0_0 = arith.constant 0 : index
    %0 = vector.load %arg1[%c0, %c0_0] : memref<96x16xf32, #tpu.memory_space<vmem>>, vector<96x16xf32>
    %cst = arith.constant 0.000000e+00 : f32
    %cst_1 = arith.constant 1.000000e+00 : f32
    %1 = vector.broadcast %cst : f32 to vector<96x16xf32>
    %2 = arith.maximumf %1, %0 : vector<96x16xf32>
    %3 = vector.broadcast %cst_1 : f32 to vector<96x16xf32>
    %4 = arith.minimumf %3, %2 : vector<96x16xf32>
    %cst_2 = arith.constant 2.550000e+02 : f32
    %5 = vector.broadcast %cst_2 : f32 to vector<96x16xf32>
    %6 = arith.mulf %4, %5 : vector<96x16xf32>
    %7 = math.floor %6 : vector<96x16xf32>
    %cst_3 = arith.constant 0.00392156886 : f32
    %8 = vector.broadcast %cst_3 : f32 to vector<96x16xf32>
    %9 = arith.mulf %7, %8 : vector<96x16xf32>
    %c0_4 = arith.constant 0 : index
    %c0_5 = arith.constant 0 : index
    %10 = vector.load %arg2[%c0_4, %c0_5] : memref<96x16xf32, #tpu.memory_space<vmem>>, vector<96x16xf32>
    tpu.vector_store %arg2[%c0_4, %c0_5], %9 {strides = array<i32>} : memref<96x16xf32, #tpu.memory_space<vmem>>, vector<96x16xf32>,
    return
  }
  func.func @transform_0(%arg0: i32) -> (i32, i32) {
    %c0_i32 = arith.constant 0 : i32
    %c0_i32_0 = arith.constant 0 : i32
    return %arg0, %c0_i32 : i32, i32
  }
  func.func @transform_1(%arg0: i32) -> (i32, i32) {
    %c0_i32 = arith.constant 0 : i32
    %c0_i32_0 = arith.constant 0 : i32
    return %arg0, %c0_i32 : i32, i32
  }
}

</mosaic_0001>

<llo_original>
// kernel: tpu_custom_call.1
$region0: #{tpu_custom_call.1}
  #allocation0 [shape = 'u32[]', space=smem, size = 0x4, offset = 0x4, fixed_abs, tag = 'smem constant byte address 0x4 - core index']
  #allocation1 [shape = 'u32[144,128]{1,0:T(1,128)}', space=vmem, size = 0x12000, scoped, tag = 'internal scratch']
  %s0 = inlined_call_operand.vmem [shape: f32[96,16], index: 0, kind: input, shape index: {}]
  %s1 = inlined_call_operand.vmem [shape: f32[96,16], index: 1, kind: output, shape index: {}]
  %s2 = sld [smem:[#allocation0]]
  $region14: #{tpu_custom_call.1} parent=0
    _
  %s4 = ssub.s32 1, %s2
  %s5 = scalar_select 0, %s4, %s2
  // Predicated region
  $region2: #{tpu_custom_call.1} parent=0 // pred_check
    _
  $region3: #{tpu_custom_call.1} parent=0 // pred_check_branch
    %7 = sbr.rel (0) target = $region5
  $region4: #{tpu_custom_call.1} parent=0 // pred_region
    _
  $region5: #{tpu_custom_call.1} parent=0 // pred_fallthru
    _
  %v8 = vld [vmem:[%s0] sm:$0xff]
  %v9 = vld [vmem:[%s0 + $0x8] sm:$0xff]
  %v10 = vld [vmem:[%s0 + $0x10] sm:$0xff]
  %v11 = vld [vmem:[%s0 + $0x18] sm:$0xff]
  %v12 = vld [vmem:[%s0 + $0x20] sm:$0xff]
  %v13 = vld [vmem:[%s0 + $0x28] sm:$0xff]
  %v14 = vld [vmem:[%s0 + $0x30] sm:$0xff]
  %v15 = vld [vmem:[%s0 + $0x38] sm:$0xff]
  %v16 = vld [vmem:[%s0 + $0x40] sm:$0xff]
  %v17 = vld [vmem:[%s0 + $0x48] sm:$0xff]
  %v18 = vld [vmem:[%s0 + $0x50] sm:$0xff]
  %v19 = vld [vmem:[%s0 + $0x58] sm:$0xff]
  %v20 = vmax.f32 %v8, 0.0
  %v21 = vmax.f32 %v9, 0.0
  %v22 = vmax.f32 %v10, 0.0
  %v23 = vmax.f32 %v11, 0.0
  %v24 = vmax.f32 %v12, 0.0
  %v25 = vmax.f32 %v13, 0.0
  %v26 = vmax.f32 %v14, 0.0
  %v27 = vmax.f32 %v15, 0.0
  %v28 = vmax.f32 %v16, 0.0
  %v29 = vmax.f32 %v17, 0.0
  %v30 = vmax.f32 %v18, 0.0
  %v31 = vmax.f32 %v19, 0.0
  %v32 = vmin.f32 %v20, 1.0
  %v33 = vmin.f32 %v21, 1.0
  %v34 = vmin.f32 %v22, 1.0
  %v35 = vmin.f32 %v23, 1.0
  %v36 = vmin.f32 %v24, 1.0
  %v37 = vmin.f32 %v25, 1.0
  %v38 = vmin.f32 %v26, 1.0
  %v39 = vmin.f32 %v27, 1.0
  %v40 = vmin.f32 %v28, 1.0
  %v41 = vmin.f32 %v29, 1.0
  %v42 = vmin.f32 %v30, 1.0
  %v43 = vmin.f32 %v31, 1.0
  %v44 = vmul.f32 %v32, 255.0
  %v45 = vmul.f32 %v33, 255.0
  %v46 = vmul.f32 %v34, 255.0
  %v47 = vmul.f32 %v35, 255.0
  %v48 = vmul.f32 %v36, 255.0
  %v49 = vmul.f32 %v37, 255.0
  %v50 = vmul.f32 %v38, 255.0
  %v51 = vmul.f32 %v39, 255.0
  %v52 = vmul.f32 %v40, 255.0
  %v53 = vmul.f32 %v41, 255.0
  %v54 = vmul.f32 %v42, 255.0
  %v55 = vmul.f32 %v43, 255.0
  %v56 = vfloor.f32 %v44
  %v57 = vfloor.f32 %v45
  %v58 = vfloor.f32 %v46
  %v59 = vfloor.f32 %v47
  %v60 = vfloor.f32 %v48
  %v61 = vfloor.f32 %v49
  %v62 = vfloor.f32 %v50
  %v63 = vfloor.f32 %v51
  %v64 = vfloor.f32 %v52
  %v65 = vfloor.f32 %v53
  %v66 = vfloor.f32 %v54
  %v67 = vfloor.f32 %v55
  %v68 = vmul.f32 %v56, 0.003921569
  %v69 = vmul.f32 %v57, 0.003921569
  %v70 = vmul.f32 %v58, 0.003921569
  %v71 = vmul.f32 %v59, 0.003921569
  %v72 = vmul.f32 %v60, 0.003921569
  %v73 = vmul.f32 %v61, 0.003921569
  %v74 = vmul.f32 %v62, 0.003921569
  %v75 = vmul.f32 %v63, 0.003921569
  %v76 = vmul.f32 %v64, 0.003921569
  %v77 = vmul.f32 %v65, 0.003921569
  %v78 = vmul.f32 %v66, 0.003921569
  %v79 = vmul.f32 %v67, 0.003921569
  %vm80 = vcmask 130048
  %81 = vst.msk [vmem:[%s1] sm:$0xff] %vm80, %v68
  %82 = vst.msk [vmem:[%s1 + $0x8] sm:$0xff] %vm80, %v69
  %83 = vst.msk [vmem:[%s1 + $0x10] sm:$0xff] %vm80, %v70
  %84 = vst.msk [vmem:[%s1 + $0x18] sm:$0xff] %vm80, %v71
  %85 = vst.msk [vmem:[%s1 + $0x20] sm:$0xff] %vm80, %v72
  %86 = vst.msk [vmem:[%s1 + $0x28] sm:$0xff] %vm80, %v73
  %87 = vst.msk [vmem:[%s1 + $0x30] sm:$0xff] %vm80, %v74
  %88 = vst.msk [vmem:[%s1 + $0x38] sm:$0xff] %vm80, %v75
  %89 = vst.msk [vmem:[%s1 + $0x40] sm:$0xff] %vm80, %v76
  %90 = vst.msk [vmem:[%s1 + $0x48] sm:$0xff] %vm80, %v77
  %91 = vst.msk [vmem:[%s1 + $0x50] sm:$0xff] %vm80, %v78
  %92 = vst.msk [vmem:[%s1 + $0x58] sm:$0xff] %vm80, %v79
  // Predicated region
  $region6: #{tpu_custom_call.1} parent=0 // pred_check
    _
  $region7: #{tpu_custom_call.1} parent=0 // pred_check_branch
    %94 = sbr.rel (0) target = $region9
  $region8: #{tpu_custom_call.1} parent=0 // pred_region
    _
  $region9: #{tpu_custom_call.1} parent=0 // pred_fallthru
    _
  // Predicated region
  $region10: #{tpu_custom_call.1} parent=0 // pred_check
    _
  $region11: #{tpu_custom_call.1} parent=0 // pred_check_branch
    %96 = sbr.rel (0) target = $region13
  $region12: #{tpu_custom_call.1} parent=0 // pred_region
    _
  $region13: #{tpu_custom_call.1} parent=0 // pred_fallthru
    _

</llo_original>
